<compile_context>
chip_gen: v5e
topology: v5e:2x2
jax: 0.10.0
libtpu: 0.0.40
codegen_flags: <defaults>
</compile_context>

<pallas_src>
import math
import functools

import jax
import jax.numpy as jnp
from jax.experimental import pallas as pl
from jax.experimental.pallas import tpu as pltpu


# ----------------------------------------------------------------------------
# Kernel 1: masked sequence output -> _generate_logits MLP
#   sequence_output = enc_out * attention_mask[..., None]
#   logits = Softplus(Linear(ReLU(Linear(sequence_output.repeat(1,1,2)))))
#   (.repeat(1,1,2) @ w1 == x @ (w1[:D] + w1[D:]) — folded in the wrapper)
#   Dropout (p=0.2) is eval-mode identity.
# ----------------------------------------------------------------------------
def _logits_kernel(x_ref, m_ref, w1_ref, b1_ref, w2_ref, b2_ref, o_ref):
    # bf16 mask multiply is exact (mask is 0/1); dot operands bf16, accum f32.
    x = x_ref[...] * m_ref[...]                                # (tm, D) bf16
    h = jnp.dot(x, w1_ref[...], preferred_element_type=jnp.float32) + b1_ref[...]
    h = jnp.maximum(h, 0.0)                                    # ReLU (f32 on VPU)
    z = jnp.dot(h.astype(jnp.bfloat16), w2_ref[...],
                preferred_element_type=jnp.float32) + b2_ref[...]
    # numerically stable Softplus (matches torch within fp tolerance)
    o_ref[...] = jnp.maximum(z, 0.0) + jnp.log(1.0 + jnp.exp(-jnp.abs(z)))


def generate_logits(x, mask, w1f, b1, w2p, b2p, *, tile_m=512):
    M, D = x.shape
    N = w2p.shape[1]                       # lane-dense (128) output width
    tm = min(tile_m, M)
    # No wrapper jnp.pad: ragged last block reads garbage rows that are never
    # consumed (only the first 2 columns of rows < M are used downstream).
    grid_m = pl.cdiv(M, tm)
    return pl.pallas_call(
        _logits_kernel,
        out_shape=jax.ShapeDtypeStruct((M, N), jnp.float32),
        grid=(grid_m,),
        in_specs=[
            pl.BlockSpec((tm, D), lambda i: (i, 0)),     # activations: tiled over M
            pl.BlockSpec((tm, 1), lambda i: (i, 0)),     # attention-mask column
            pl.BlockSpec((D, D), lambda i: (0, 0)),      # folded w1 (bf16, resident)
            pl.BlockSpec((1, D), lambda i: (0, 0)),      # b1 (f32)
            pl.BlockSpec((D, N), lambda i: (0, 0)),      # padded w2 (bf16, resident)
            pl.BlockSpec((1, N), lambda i: (0, 0)),      # padded b2 (f32)
        ],
        out_specs=pl.BlockSpec((tm, N), lambda i: (i, 0)),
        compiler_params=pltpu.CompilerParams(dimension_semantics=("parallel",)),
    )(x, mask, w1f, b1, w2p, b2p)


# ----------------------------------------------------------------------------
# Kernel 2: _gumbel_sparsity_control, class-1 channel only, layout (BB, S)
# with the sequence axis on lanes and up to 8 batch rows on sublanes.
#   gumbel = -log(-log(U));  noisy = (gumbel + logits) / tau
#   samples = softmax over seq positions < L;  out = running max over n samples
# ----------------------------------------------------------------------------
def _gumbel_kernel(scal_ref, logits_ref, u_ref, o_ref, *, inv_tau):
    L = scal_ref[0]                        # batch_max_seq_length
    n = scal_ref[1]                        # ceil(L * k) actual sample count
    BB, S = o_ref.shape
    logit = logits_ref[...]                                     # (BB, S) f32
    pos = jax.lax.broadcasted_iota(jnp.int32, (BB, S), 1)
    valid = pos < L

    def body(j, acc):
        u = u_ref[j]                                            # (BB, S) uniform
        g = -jnp.log(-jnp.log(u))                               # Gumbel(0,1)
        noisy = (g + logit) * inv_tau
        noisy = jnp.where(valid, noisy, -jnp.inf)               # truncate at L
        m = jnp.max(noisy, axis=-1, keepdims=True)
        e = jnp.exp(noisy - m)                                  # 0 at pos >= L
        s = e / jnp.sum(e, axis=-1, keepdims=True)
        return jnp.maximum(acc, s)

    # softmax outputs are > 0, so zero-init is an identity for the running max;
    # it also makes n == 0 (fully masked batch) return zeros, not stale VMEM.
    o_ref[...] = jax.lax.fori_loop(
        0, n, body, jnp.zeros((BB, S), jnp.float32))


def gumbel_sparsity_control(logits1, u, scalars, *, tau):
    B, S = logits1.shape
    n_max = u.shape[0]
    BB = 8 if B >= 8 else B                # pack up to 8 batch rows on sublanes
    return pl.pallas_call(
        functools.partial(_gumbel_kernel, inv_tau=float(1.0 / tau)),
        out_shape=jax.ShapeDtypeStruct((B, S), jnp.float32),
        grid_spec=pltpu.PrefetchScalarGridSpec(
            num_scalar_prefetch=1,
            grid=(pl.cdiv(B, BB),),
            in_specs=[
                pl.BlockSpec((BB, S), lambda b, scal: (b, 0)),          # logits
                pl.BlockSpec((n_max, BB, S), lambda b, scal: (0, b, 0)),  # noise
            ],
            out_specs=pl.BlockSpec((BB, S), lambda b, scal: (b, 0)),
        ),
        compiler_params=pltpu.CompilerParams(dimension_semantics=("parallel",)),
    )(scalars, logits1, u)


# ----------------------------------------------------------------------------
# Wrapper: full token-level forward of _Identifier (remove_query_input=False)
# ----------------------------------------------------------------------------
@functools.partial(jax.jit, static_argnames=("k", "tau"))
def identifier_forward_token(output_embs, attention_mask, params, noise_key, *, k, tau):
    B, S, D = output_embs.shape
    # bf16 activation stream into the MXU (a real encoder would emit bf16 directly).
    x = output_embs.reshape(B * S, D).astype(jnp.bfloat16)
    m = attention_mask.reshape(B * S, 1).astype(jnp.bfloat16)

    # Fold the `.repeat(1, 1, 2)` into the first Linear weight; bf16 MXU weights.
    w1f = (params["w1"][:D] + params["w1"][D:]).astype(jnp.bfloat16)
    b1 = params["b1"].astype(jnp.float32)
    LANE = 128
    w2p = jnp.pad(params["w2"], ((0, 0), (0, LANE - params["w2"].shape[1]))
                  ).astype(jnp.bfloat16)
    b2p = jnp.pad(params["b2"], ((0, 0), (0, LANE - params["b2"].shape[1]))
                  ).astype(jnp.float32)

    logits128 = generate_logits(x, m, w1f, b1, w2p, b2p)
    # forward() only returns the class-1 channel; class 0 never influences it
    # (the gumbel softmax is per-channel), so keep only column 1.
    logits1 = logits128[:, 1].reshape(B, S)

    # batch_max_seq_length & n_samples stay on-device (no host sync, no per-length
    # recompiles); the -1e-6 guards float32 ceil at exact-integer boundaries.
    L = jnp.max(jnp.sum(attention_mask, axis=-1)).astype(jnp.int32)
    n = jnp.ceil(L.astype(jnp.float32) * k - 1e-6).astype(jnp.int32)
    n_max = int(math.ceil(S * k))          # static upper bound on sample count
    scalars = jnp.stack([L, n])

    # Uniform noise for the Gumbel trick (minval excludes 0, as the torch path
    # effectively does); only the first n of n_max samples are consumed.
    u = jax.random.uniform(noise_key, (n_max, B, S), dtype=jnp.float32,
                           minval=1e-6, maxval=1.0)

    # positions >= L come out exactly 0 (masked softmax), matching the reference's
    # zero-filled `outputs` tensor.
    return gumbel_sparsity_control(logits1, u, scalars, tau=tau)


if __name__ == "__main__":
    key = jax.random.PRNGKey(0)
    B, S, D = 2, 16, 32          # batch, seq, embedding_dim
    k_frac, tau = 0.3, 0.5
    k_emb, k_w1, k_w2, k_noise = jax.random.split(key, 4)

    # TODO(synk): the pretrained transformer encoder (encoder_class.from_pretrained)
    # has no in-script equivalent; its last-hidden-state output is modeled here by
    # deterministic random embeddings fed directly into the kernels.
    output_embs = jax.random.normal(k_emb, (B, S, D), dtype=jnp.float32)

    lengths = jnp.array([12, 10], dtype=jnp.int32)
    attention_mask = (jnp.arange(S)[None, :] < lengths[:, None]).astype(jnp.float32)

    # _generate_logits parameters: Linear(2D -> D), Linear(D -> 2), stored as (in, out)
    params = {
        "w1": jax.random.normal(k_w1, (2 * D, D), jnp.float32) / jnp.sqrt(2.0 * D),
        "b1": jnp.zeros((1, D), jnp.float32),
        "w2": jax.random.normal(k_w2, (D, 2), jnp.float32) / jnp.sqrt(1.0 * D),
        "b2": jnp.zeros((1, 2), jnp.float32),
    }

    out = identifier_forward_token(
        output_embs, attention_mask, params, k_noise, k=k_frac, tau=tau
    )
    jax.block_until_ready(out)
    assert out.shape == (B, S) and out.dtype == jnp.float32
    assert bool(jnp.all(jnp.isfinite(out)))
    print("KERNEL_OK")
</pallas_src>

<mosaic_0001>
module attributes {stable_mosaic.version = 11 : i64} {
  func.func @_logits_kernel(%arg0: i32, %arg1: memref<32x32xbf16, #tpu.memory_space<vmem>>, %arg2: memref<32x1xbf16, #tpu.memory_space<vmem>>, %arg3: memref<32x32xbf16, #tpu.memory_space<vmem>>, %arg4: memref<1x32xf32, #tpu.memory_space<vmem>>, %arg5: memref<32x128xbf16, #tpu.memory_space<vmem>>, %arg6: memref<1x128xf32, #tpu.memory_space<vmem>>, %arg7: memref<32x128xf32, #tpu.memory_space<vmem>>) attributes {dimension_semantics = [#tpu.dimension_semantics<parallel>], iteration_bounds = array<i64: 1>, scalar_prefetch = 0 : i64, scratch_operands = 0 : i64, tpu.core_type = #tpu.core_type<tc>, window_params = [{transform_indices = @transform_0, window_bounds = array<i64: 32, 32>}, {transform_indices = @transform_1, window_bounds = array<i64: 32, 1>}, {pipeline_mode = #tpu.pipeline_mode<synchronous>, transform_indices = @transform_2, window_bounds = array<i64: 32, 32>}, {pipeline_mode = #tpu.pipeline_mode<synchronous>, transform_indices = @transform_3, window_bounds = array<i64: 1, 32>}, {pipeline_mode = #tpu.pipeline_mode<synchronous>, transform_indices = @transform_4, window_bounds = array<i64: 32, 128>}, {pipeline_mode = #tpu.pipeline_mode<synchronous>, transform_indices = @transform_5, window_bounds = array<i64: 1, 128>}, {transform_indices = @transform_6, window_bounds = array<i64: 32, 128>}]} {
    %c0 = arith.constant 0 : index
    %c0_0 = arith.constant 0 : index
    %0 = vector.load %arg1[%c0, %c0_0] : memref<32x32xbf16, #tpu.memory_space<vmem>>, vector<32x32xbf16>
    %c0_1 = arith.constant 0 : index
    %c0_2 = arith.constant 0 : index
    %1 = vector.load %arg2[%c0_1, %c0_2] : memref<32x1xbf16, #tpu.memory_space<vmem>>, vector<32x1xbf16>
    %2 = vector.broadcast %1 : vector<32x1xbf16> to vector<32x32xbf16>
    %3 = arith.mulf %0, %2 : vector<32x32xbf16>
    %c0_3 = arith.constant 0 : index
    %c0_4 = arith.constant 0 : index
    %4 = vector.load %arg3[%c0_3, %c0_4] : memref<32x32xbf16, #tpu.memory_space<vmem>>, vector<32x32xbf16>
    %cst = arith.constant dense<0.000000e+00> : vector<32x32xf32>
    %5 = tpu.matmul %3, %4, %cst {dimension_numbers = #tpu.dot_dimension_numbers<[1], [0], [0], [1], [0, 0, 1, 1], [], []>} : vector<32x32xbf16>, vector<32x32xbf16>, vector<32x32xf32> -> vector<32x32xf32>
    %c0_5 = arith.constant 0 : index
    %c0_6 = arith.constant 0 : index
    %6 = vector.load %arg4[%c0_5, %c0_6] : memref<1x32xf32, #tpu.memory_space<vmem>>, vector<1x32xf32>
    %7 = vector.broadcast %6 : vector<1x32xf32> to vector<32x32xf32>
    %8 = arith.addf %5, %7 : vector<32x32xf32>
    %cst_7 = arith.constant 0.000000e+00 : f32
    %9 = vector.broadcast %cst_7 : f32 to vector<32x32xf32>
    %10 = arith.maximumf %8, %9 : vector<32x32xf32>
    %11 = arith.truncf %10 : vector<32x32xf32> to vector<32x32xbf16>
    %c0_8 = arith.constant 0 : index
    %c0_9 = arith.constant 0 : index
    %12 = vector.load %arg5[%c0_8, %c0_9] : memref<32x128xbf16, #tpu.memory_space<vmem>>, vector<32x128xbf16>
    %cst_10 = arith.constant dense<0.000000e+00> : vector<32x128xf32>
    %13 = tpu.matmul %11, %12, %cst_10 {dimension_numbers = #tpu.dot_dimension_numbers<[1], [0], [0], [1], [0, 0, 1, 1], [], []>} : vector<32x32xbf16>, vector<32x128xbf16>, vector<32x128xf32> -> vector<32x128xf32>
    %c0_11 = arith.constant 0 : index
    %c0_12 = arith.constant 0 : index
    %14 = vector.load %arg6[%c0_11, %c0_12] : memref<1x128xf32, #tpu.memory_space<vmem>>, vector<1x128xf32>
    %15 = vector.broadcast %14 : vector<1x128xf32> to vector<32x128xf32>
    %16 = arith.addf %13, %15 : vector<32x128xf32>
    %cst_13 = arith.constant 0.000000e+00 : f32
    %17 = vector.broadcast %cst_13 : f32 to vector<32x128xf32>
    %18 = arith.maximumf %16, %17 : vector<32x128xf32>
    %19 = math.absf %16 : vector<32x128xf32>
    %cst_14 = arith.constant 0.000000e+00 : f32
    %20 = vector.broadcast %cst_14 : f32 to vector<32x128xf32>
    %21 = arith.subf %20, %19 : vector<32x128xf32>
    %22 = math.exp %21 : vector<32x128xf32>
    %cst_15 = arith.constant 1.000000e+00 : f32
    %23 = vector.broadcast %cst_15 : f32 to vector<32x128xf32>
    %24 = arith.addf %23, %22 : vector<32x128xf32>
    %25 = math.log %24 : vector<32x128xf32>
    %26 = arith.addf %18, %25 : vector<32x128xf32>
    %c0_16 = arith.constant 0 : index
    %c0_17 = arith.constant 0 : index
    %27 = vector.load %arg7[%c0_16, %c0_17] : memref<32x128xf32, #tpu.memory_space<vmem>>, vector<32x128xf32>
    tpu.vector_store %arg7[%c0_16, %c0_17], %26 {strides = array<i32>} : memref<32x128xf32, #tpu.memory_space<vmem>>, vector<32x128xf32>,
    return
  }
  func.func @transform_0(%arg0: i32) -> (i32, i32) {
    %c0_i32 = arith.constant 0 : i32
    %c0_i32_0 = arith.constant 0 : i32
    return %arg0, %c0_i32 : i32, i32
  }
  func.func @transform_1(%arg0: i32) -> (i32, i32) {
    %c0_i32 = arith.constant 0 : i32
    %c0_i32_0 = arith.constant 0 : i32
    return %arg0, %c0_i32 : i32, i32
  }
  func.func @transform_2(%arg0: i32) -> (i32, i32) {
    %c0_i32 = arith.constant 0 : i32
    %c0_i32_0 = arith.constant 0 : i32
    %c0_i32_1 = arith.constant 0 : i32
    return %c0_i32, %c0_i32_0 : i32, i32
  }
  func.func @transform_3(%arg0: i32) -> (i32, i32) {
    %c0_i32 = arith.constant 0 : i32
    %c0_i32_0 = arith.constant 0 : i32
    %c0_i32_1 = arith.constant 0 : i32
    return %c0_i32, %c0_i32_0 : i32, i32
  }
  func.func @transform_4(%arg0: i32) -> (i32, i32) {
    %c0_i32 = arith.constant 0 : i32
    %c0_i32_0 = arith.constant 0 : i32
    %c0_i32_1 = arith.constant 0 : i32
    return %c0_i32, %c0_i32_0 : i32, i32
  }
  func.func @transform_5(%arg0: i32) -> (i32, i32) {
    %c0_i32 = arith.constant 0 : i32
    %c0_i32_0 = arith.constant 0 : i32
    %c0_i32_1 = arith.constant 0 : i32
    return %c0_i32, %c0_i32_0 : i32, i32
  }
  func.func @transform_6(%arg0: i32) -> (i32, i32) {
    %c0_i32 = arith.constant 0 : i32
    %c0_i32_0 = arith.constant 0 : i32
    return %arg0, %c0_i32 : i32, i32
  }
}

module attributes {stable_mosaic.version = 11 : i64} {
  func.func @_gumbel_kernel(%arg0: i32, %arg1: memref<2xi32, #tpu.memory_space<smem>>, %arg2: memref<2x16xf32, #tpu.memory_space<vmem>>, %arg3: memref<5x2x16xf32, #tpu.memory_space<vmem>>, %arg4: memref<2x16xf32, #tpu.memory_space<vmem>>) attributes {dimension_semantics = [#tpu.dimension_semantics<parallel>], iteration_bounds = array<i64: 1>, scalar_prefetch = 1 : i64, scratch_operands = 0 : i64, tpu.core_type = #tpu.core_type<tc>, window_params = [{transform_indices = @transform_0, window_bounds = array<i64: 2, 16>}, {transform_indices = @transform_1, window_bounds = array<i64: 5, 2, 16>}, {transform_indices = @transform_2, window_bounds = array<i64: 2, 16>}]} {
    %c0 = arith.constant 0 : index
    %0 = memref.load %arg1[%c0] : memref<2xi32, #tpu.memory_space<smem>>
    %c1 = arith.constant 1 : index
    %1 = memref.load %arg1[%c1] : memref<2xi32, #tpu.memory_space<smem>>
    %c0_0 = arith.constant 0 : index
    %c0_1 = arith.constant 0 : index
    %2 = vector.load %arg2[%c0_0, %c0_1] : memref<2x16xf32, #tpu.memory_space<vmem>>, vector<2x16xf32>
    %3 = tpu.iota {dimensions = array<i32: 1>} : vector<2x16xi32>
    %4 = vector.broadcast %0 : i32 to vector<2x16xi32>
    %5 = arith.cmpi slt, %3, %4 : vector<2x16xi32>
    %cst = arith.constant 0.000000e+00 : f32
    %6 = vector.broadcast %cst : f32 to vector<2x16xf32>
    %c0_i32 = arith.constant 0 : i32
    %7 = arith.subi %1, %c0_i32 : i32
    %8 = arith.addi %c0_i32, %7 : i32
    %c1_i32 = arith.constant 1 : i32
    %9 = scf.for %arg5 = %c0_i32 to %8 step %c1_i32 iter_args(%arg6 = %6) -> (vector<2x16xf32>)  : i32 {
      %11 = arith.index_cast %arg5 : i32 to index
      %c0_4 = arith.constant 0 : index
      %c0_5 = arith.constant 0 : index
      %12 = vector.load %arg3[%11, %c0_4, %c0_5] : memref<5x2x16xf32, #tpu.memory_space<vmem>>, vector<1x2x16xf32>
      %13 = vector.shape_cast %12 : vector<1x2x16xf32> to vector<2x16xf32>
      %14 = math.log %13 : vector<2x16xf32>
      %cst_6 = arith.constant 0.000000e+00 : f32
      %15 = vector.broadcast %cst_6 : f32 to vector<2x16xf32>
      %16 = arith.subf %15, %14 : vector<2x16xf32>
      %17 = math.log %16 : vector<2x16xf32>
      %cst_7 = arith.constant 0.000000e+00 : f32
      %18 = vector.broadcast %cst_7 : f32 to vector<2x16xf32>
      %19 = arith.subf %18, %17 : vector<2x16xf32>
      %20 = arith.addf %19, %2 : vector<2x16xf32>
      %cst_8 = arith.constant 2.000000e+00 : f32
      %21 = vector.broadcast %cst_8 : f32 to vector<2x16xf32>
      %22 = arith.mulf %20, %21 : vector<2x16xf32>
      %cst_9 = arith.constant 0xFF800000 : f32
      %23 = vector.broadcast %cst_9 : f32 to vector<2x16xf32>
      %24 = arith.select %5, %22, %23 : vector<2x16xi1>, vector<2x16xf32>
      %cst_10 = arith.constant dense<0xFF800000> : vector<2xf32>
      %25 = vector.multi_reduction <maximumf>, %24, %cst_10 [1] : vector<2x16xf32> to vector<2xf32>
      %26 = vector.shape_cast %25 : vector<2xf32> to vector<2x1xf32>
      %27 = vector.broadcast %26 : vector<2x1xf32> to vector<2x16xf32>
      %28 = arith.subf %24, %27 : vector<2x16xf32>
      %29 = math.exp %28 : vector<2x16xf32>
      %cst_11 = arith.constant dense<0.000000e+00> : vector<2xf32>
      %30 = vector.multi_reduction <add>, %29, %cst_11 [1] : vector<2x16xf32> to vector<2xf32>
      %31 = vector.shape_cast %30 : vector<2xf32> to vector<2x1xf32>
      %32 = vector.broadcast %31 : vector<2x1xf32> to vector<2x16xf32>
      %33 = arith.divf %29, %32 : vector<2x16xf32>
      %34 = arith.maximumf %arg6, %33 : vector<2x16xf32>
      scf.yield %34 : vector<2x16xf32>
    }
    %c0_2 = arith.constant 0 : index
    %c0_3 = arith.constant 0 : index
    %10 = vector.load %arg4[%c0_2, %c0_3] : memref<2x16xf32, #tpu.memory_space<vmem>>, vector<2x16xf32>
    tpu.vector_store %arg4[%c0_2, %c0_3], %9 {strides = array<i32>} : memref<2x16xf32, #tpu.memory_space<vmem>>, vector<2x16xf32>,
    return
  }
  func.func @transform_0(%arg0: i32, %arg1: memref<2xi32, #tpu.memory_space<smem>>) -> (i32, i32) {
    %c0_i32 = arith.constant 0 : i32
    %c0_i32_0 = arith.constant 0 : i32
    return %arg0, %c0_i32 : i32, i32
  }
  func.func @transform_1(%arg0: i32, %arg1: memref<2xi32, #tpu.memory_space<smem>>) -> (i32, i32, i32) {
    %c0_i32 = arith.constant 0 : i32
    %c0_i32_0 = arith.constant 0 : i32
    %c0_i32_1 = arith.constant 0 : i32
    return %c0_i32, %arg0, %c0_i32_0 : i32, i32, i32
  }
  func.func @transform_2(%arg0: i32, %arg1: memref<2xi32, #tpu.memory_space<smem>>) -> (i32, i32) {
    %c0_i32 = arith.constant 0 : i32
    %c0_i32_0 = arith.constant 0 : i32
    return %arg0, %c0_i32 : i32, i32
  }
}

</mosaic_0001>

<llo_original>
// kernel: squeeze.5
$region0: #{squeeze.5}
  %s0 = inlined_call_operand.vmem [shape: f32[32], index: 0, kind: input, shape index: {}]
  %s1 = inlined_call_operand.vmem [shape: f32[2,16], index: 1, kind: output, shape index: {}]
  $region1: #{squeeze.5} parent=0
    #allocation0 [shape = 'u8[4096]{0}', space=vmem, size = 0x1000, scoped, tag = 'scoped mem for output reshape']
    #allocation1 [shape = 'u8[4096]{0}', space=vmem, size = 0x1000, scoped, tag = 'scoped mem for input reshape']
    %s3 = ssub.s32 2, 1
    %v4 = vld [vmem:[%s0] sm:%s3]
    %5 = vst [vmem:[#allocation1] sm:%s3] %v4
    %v6 = vld [vmem:[#allocation1] sm:$0x1]
    %vm7 = vcmask 130048
    %8 = vst.msk [vmem:[#allocation0] sm:$0x1] %vm7, %v6
    %v9 = vld [vmem:[#allocation1] sm:$0x1]
    %10 = vrot.lane.b32.xlu0 %v9, 112
    %v11 = vpop.permute.xlu0 %10
    %vm12 = vcmask 130048
    %s13 = scalar_lea.vmem [#allocation0], 1
    %14 = vst.msk [vmem:[%s13] sm:$0x1] %vm12, %v11
    %s16 = ssub.s32 4, 1
    %v17 = vld [vmem:[#allocation0] sm:%s16]
    %s19 = ssub.s32 4, 1
    %20 = vst [vmem:[%s1] sm:%s19] %v17

// kernel: identifier_forward_token.3
$region0: #{identifier_forward_token.3}
  #allocation0 [shape = 'u32[]', space=smem, size = 0x4, offset = 0x4, fixed_abs, tag = 'smem constant byte address 0x4 - core index']
  #allocation1 [shape = 'u32[72,128]{1,0:T(1,128)}', space=vmem, size = 0x9000, scoped, tag = 'internal scratch']
  #allocation2 [shape = 's32[1]{0}', space=sflag, size = 0x4, scoped, tag = 'scoped memory for identifier_forward_token.3']
  #allocation3 [shape = 'u8[512]{0}', space=smem, size = 0x200, scoped, tag = 'prefetched SMEM operand 0']
  %s0 = inlined_call_operand.vmem [shape: s32[2], index: 0, kind: input, shape index: {}]
  %s1 = inlined_call_operand.vmem [shape: f32[2,16], index: 1, kind: input, shape index: {}]
  %s2 = inlined_call_operand.vmem [shape: f32[5,2,16], index: 2, kind: input, shape index: {}]
  %s3 = inlined_call_operand.hbm [shape: f32[2,16], index: 3, kind: output, shape index: {}]
  %s4 = sld [smem:[#allocation0]]
  $region25: #{identifier_forward_token.3} parent=0
    _
  %s6 = ssub.s32 1, %s4
  %s7 = scalar_select 0, %s6, %s4
  %s9 = sshll.u32 %s0, 4
  %s10 = int_to_ptr.vmem [resolvable:$true] %s9
  %12 = dma.vmem_to_smem %s10, 16, [#allocation3], [#allocation2]
  %14 = dma.done [#allocation2], 16
  %15 = sfence
  $region1: #{identifier_forward_token.3} parent=0
    #allocation4 [shape = 'u8[1024]{0}', space=vmem, size = 0x400, scoped, tag = 'output window, operand 0, single buffered']
    #allocation5 [shape = 's32[1]{0}', space=sflag, size = 0x4, scoped, tag = 'scoped memory for identifier_forward_token.3']
    %16 = vsyncpa [#allocation5], 0
    // Predicated region
    $region2: #{identifier_forward_token.3} parent=1 // pred_check
      _
    $region3: #{identifier_forward_token.3} parent=1 // pred_check_branch
      %18 = sbr.rel (0) target = $region5
    $region4: #{identifier_forward_token.3} parent=1 // pred_region
      _
    $region5: #{identifier_forward_token.3} parent=1 // pred_fallthru
      _
    // Predicated region
    $region6: #{identifier_forward_token.3} parent=1 // pred_check
      _
    $region7: #{identifier_forward_token.3} parent=1 // pred_check_branch
      %20 = sbr.rel (0) target = $region9
    $region8: #{identifier_forward_token.3} parent=1 // pred_region
      _
    $region9: #{identifier_forward_token.3} parent=1 // pred_fallthru
      _
    %s21 = sld [smem:[#allocation3]]
    %s22 = sld [smem:[#allocation3 + $0x1]]
    %v23 = vld [vmem:[%s1] sm:$0x3]
    %v24 = vlaneseq
    %v25 = vand.u32 %v24, 127
    %v26 = vstv %s21
    %vm27 = vcmp.lt.s32.totalorder %v25, %v26
    // While loop
    $region10: #{identifier_forward_token.3} parent=1 // loop_pre_header
      _
    $region11: #{identifier_forward_token.3} parent=1 // loop_header
      %s29 = sphi 0, %s31
      %p30 = scmp.ge.s32.totalorder %s29, %s22
      %v34 = vphi 0.0, %v72
    $region12: #{identifier_forward_token.3} parent=1 // loop_header_branch
      %33 = sbr.rel (%p30) target = $region16
    $region13: #{identifier_forward_token.3} parent=1 // loop_body
      %s35 = smul.u32 %s29, 2
      %s36 = scalar_lea.vmem %s2, %s35
      %v37 = vld [vmem:[%s36] sm:$0x3]
      %v38 = vlog2.pop %v37
      %v39 = vmul.f32 %v38, 0.6931472
      %v40 = vsub.f32 0.0, %v39
      %v41 = vlog2.pop %v40
      %v42 = vmul.f32 %v41, 0.6931472
      %v43 = vsub.f32 0.0, %v42
      %v44 = vadd.f32 %v43, %v23
      %v45 = vmul.f32 %v44, 2.0
      %v46 = vsel %vm27, %v45, -inf
      %vm47 = vcmask 123904
      %v48 = vsel %vm47, %v46, -inf
      %49 = vmax.xlane.f32.xlu0 %v48
      %v50 = vpop.xlane.xlu0 %49
      %v51 = vsub.f32 %v46, %v50
      %v52 = vmul.f32 %v51, 1.442695
      %v53 = vpow.pop %v52
      %v54 = vsel %vm47, %v53, 0.0
      %55 = vadd.xlane.f32.xlu0 %v54
      %v56 = vpop.xlane.xlu0 %55
      %v57 = vrcp.pop %v56
      %v58 = vmul.f32 %v56, %v57
      %v59 = vsub.f32 1.0, %v58
      %v60 = vmul.f32 %v57, %v59
      %v61 = vadd.f32 %v57, %v60
      %vm62 = vweird.f32 %v56
      %vm63 = vweird.f32 %v57
      %vm64 = vmor %vm62, %vm63
      %v65 = vsel %vm64, %v57, %v61
      %v66 = vand.u32 2147483647, %v56
      %vm67 = vcmp.eq.f32.partialorder %v66, 8.507059e+37
      %v68 = vand.u32 %v56, 2147483648
      %v69 = vor.u32 1.1754944e-38, %v68
      %v70 = vsel %vm67, %v69, %v65
      %v71 = vmul.f32 %v53, %v70
      %v72 = vmax.f32 %v34, %v71
    $region14: #{identifier_forward_token.3} parent=1 // loop_footer
      %s31 = sadd.s32 %s29, 1
    $region15: #{identifier_forward_token.3} parent=1 // loop_footer_branch
      %28 = sbr.rel target = $region11
    $region16: #{identifier_forward_token.3} parent=1 // loop_exit
      _
    %vm73 = vcmask 123904
    %74 = vst.msk [vmem:[#allocation4] sm:$0x3] %vm73, %v34
    // Predicated region
    $region17: #{identifier_forward_token.3} parent=1 // pred_check
      _
    $region18: #{identifier_forward_token.3} parent=1 // pred_check_branch
      %76 = sbr.rel (0) target = $region20
    $region19: #{identifier_forward_token.3} parent=1 // pred_region
      %78 = vsyncadd [#allocation5], 0
      %s80 = sshll.u32 [#allocation4], 4
      %s81 = int_to_ptr.vmem [resolvable:$true] %s80
      %s82 = sshll.u32 %s3, 4
      %s83 = int_to_ptr.hbm [resolvable:$true] %s82
      %85 = dma.vmem_to_hbm [thread:$0]  %s81, 32, %s83, [#allocation5]
    $region20: #{identifier_forward_token.3} parent=1 // pred_fallthru
      _
    // Predicated region
    $region21: #{identifier_forward_token.3} parent=1 // pred_check
      _
    $region22: #{identifier_forward_token.3} parent=1 // pred_check_branch
      %87 = sbr.rel (0) target = $region24
    $region23: #{identifier_forward_token.3} parent=1 // pred_region
      %89 = dma.done [#allocation5], 32
    $region24: #{identifier_forward_token.3} parent=1 // pred_fallthru
      _
    %90 = vsyncpa [#allocation5], 1

// kernel: identifier_forward_token.2
$region0: #{identifier_forward_token.2}
  #allocation0 [shape = 'u32[]', space=smem, size = 0x4, offset = 0x4, fixed_abs, tag = 'smem constant byte address 0x4 - core index']
  #allocation1 [shape = 'u32[72,128]{1,0:T(1,128)}', space=vmem, size = 0x9000, scoped, tag = 'internal scratch']
  %s0 = inlined_call_operand.vmem [shape: bf16[32,32], index: 0, kind: input, shape index: {}]
  %s1 = inlined_call_operand.vmem [shape: bf16[32,1], index: 1, kind: input, shape index: {}]
  %s2 = inlined_call_operand.vmem [shape: bf16[32,32], index: 2, kind: input, shape index: {}]
  %s3 = inlined_call_operand.vmem [shape: f32[1,32], index: 3, kind: input, shape index: {}]
  %s4 = inlined_call_operand.vmem [shape: bf16[32,128], index: 4, kind: input, shape index: {}]
  %s5 = inlined_call_operand.vmem [shape: f32[1,128], index: 5, kind: input, shape index: {}]
  %s6 = inlined_call_operand.vmem [shape: f32[32,128], index: 6, kind: output, shape index: {}]
  %s7 = sld [smem:[#allocation0]]
  $region34: #{identifier_forward_token.2} parent=0
    _
  %s9 = ssub.s32 1, %s7
  %s10 = scalar_select 0, %s9, %s7
  // Predicated region
  $region2: #{identifier_forward_token.2} parent=0 // pred_check
    _
  $region3: #{identifier_forward_token.2} parent=0 // pred_check_branch
    %12 = sbr.rel (0) target = $region5
  $region4: #{identifier_forward_token.2} parent=0 // pred_region
    _
  $region5: #{identifier_forward_token.2} parent=0 // pred_fallthru
    _
  // Predicated region
  $region6: #{identifier_forward_token.2} parent=0 // pred_check
    _
  $region7: #{identifier_forward_token.2} parent=0 // pred_check_branch
    %14 = sbr.rel (0) target = $region9
  $region8: #{identifier_forward_token.2} parent=0 // pred_region
    _
  $region9: #{identifier_forward_token.2} parent=0 // pred_fallthru
    _
  // Predicated region
  $region10: #{identifier_forward_token.2} parent=0 // pred_check
    _
  $region11: #{identifier_forward_token.2} parent=0 // pred_check_branch
    %16 = sbr.rel (0) target = $region13
  $region12: #{identifier_forward_token.2} parent=0 // pred_region
    _
  $region13: #{identifier_forward_token.2} parent=0 // pred_fallthru
    _
  // Predicated region
  $region14: #{identifier_forward_token.2} parent=0 // pred_check
    _
  $region15: #{identifier_forward_token.2} parent=0 // pred_check_branch
    %18 = sbr.rel (0) target = $region17
  $region16: #{identifier_forward_token.2} parent=0 // pred_region
    _
  $region17: #{identifier_forward_token.2} parent=0 // pred_fallthru
    _
  // Predicated region
  $region18: #{identifier_forward_token.2} parent=0 // pred_check
    _
  $region19: #{identifier_forward_token.2} parent=0 // pred_check_branch
    %20 = sbr.rel (0) target = $region21
  $region20: #{identifier_forward_token.2} parent=0 // pred_region
    _
  $region21: #{identifier_forward_token.2} parent=0 // pred_fallthru
    _
  // Predicated region
  $region22: #{identifier_forward_token.2} parent=0 // pred_check
    _
  $region23: #{identifier_forward_token.2} parent=0 // pred_check_branch
    %22 = sbr.rel (0) target = $region25
  $region24: #{identifier_forward_token.2} parent=0 // pred_region
    _
  $region25: #{identifier_forward_token.2} parent=0 // pred_fallthru
    _
  %v24 = vld [vmem:[%s0] sm:$0xf]
  %v25 = vld [vmem:[%s0 + $0x4] sm:$0xf]
  %v26 = vld [vmem:[%s0 + $0x8] sm:$0xf]
  %v27 = vld [vmem:[%s0 + $0xc] sm:$0xf]
  %v28 = vld [vmem:[%s1] sm:$0xf]
  %v29 = vld [vmem:[%s1 + $0x4] sm:$0xf]
  %v30 = vld [vmem:[%s1 + $0x8] sm:$0xf]
  %v31 = vld [vmem:[%s1 + $0xc] sm:$0xf]
  %33 = vset.pattern.permute.xlu0 0
  %34 = vperm.xlu0 %33, %v28
  %v35 = vpop.permute.xlu0 %34
  %v38 = vunpack.c.l.s4 839922192
  %v39 = vunpack.c.0.s8 %v38
  %v40 = vperm.slane %v35, %v39
  %42 = vset.pattern.permute.xlu0 0
  %43 = vperm.xlu0 %42, %v29
  %v44 = vpop.permute.xlu0 %43
  %v47 = vunpack.c.l.s4 839922192
  %v48 = vunpack.c.0.s8 %v47
  %v49 = vperm.slane %v44, %v48
  %51 = vset.pattern.permute.xlu0 0
  %52 = vperm.xlu0 %51, %v30
  %v53 = vpop.permute.xlu0 %52
  %v56 = vunpack.c.l.s4 839922192
  %v57 = vunpack.c.0.s8 %v56
  %v58 = vperm.slane %v53, %v57
  %60 = vset.pattern.permute.xlu0 0
  %61 = vperm.xlu0 %60, %v31
  %v62 = vpop.permute.xlu0 %61
  %v65 = vunpack.c.l.s4 839922192
  %v66 = vunpack.c.0.s8 %v65
  %v67 = vperm.slane %v62, %v66
  %v68 = vunpack.c.l.bf16 %v24
  %v69 = vunpack.c.l.bf16 %v25
  %v70 = vunpack.c.l.bf16 %v26
  %v71 = vunpack.c.l.bf16 %v27
  %v72 = vunpack.c.l.bf16 %v40
  %v73 = vunpack.c.l.bf16 %v49
  %v74 = vunpack.c.l.bf16 %v58
  %v75 = vunpack.c.l.bf16 %v67
  %v76 = vmul.f32 %v68, %v72
  %v77 = vmul.f32 %v69, %v73
  %v78 = vmul.f32 %v70, %v74
  %v79 = vmul.f32 %v71, %v75
  %v80 = vpack.c.bf16 %v77, %v76
  %v81 = vpack.c.bf16 %v79, %v78
  %v82 = vld [vmem:[%s2] sm:$0xf]
  %v83 = vld [vmem:[%s2 + $0x4] sm:$0xf]
  %v84 = vld [vmem:[%s2 + $0x8] sm:$0xf]
  %v85 = vld [vmem:[%s2 + $0xc] sm:$0xf]
  %v86 = vld [vmem:[%s3] sm:$0x1]
  %v88 = vperm.slane %v86, 0
  %v94 = vunpack.c.l.b16 %v82
  %v95 = vunpack.c.l.b16 %v83
  %v96 = vunpack.c.l.b16 %v84
  %v97 = vunpack.c.l.b16 %v85
  %v98 = vpack.c.b16 %v95, %v94
  %v99 = vpack.c.b16 %v97, %v96
  %vm102 = vcmask 261120
  %v104 = vsel %vm102, %v80, 0
  %v107 = vsel %vm102, %v81, 0
  %109 = vmatpush.bf16.msra.mxu0 0
  %110 = vmatpush.bf16.msra.mxu0 0
  %111 = vmatpush.bf16.msra.mxu0 0
  %112 = vmatpush.bf16.msra.mxu0 0
  %113 = vmatpush.bf16.msra.mxu0 0
  %114 = vmatpush.bf16.msra.mxu0 0
  %115 = vmatpush.bf16.msra.mxu0 %v99
  %116 = vmatpush.bf16.msra.mxu0 %v98
  %117 = vmatmul.bf16.gmra.mxu0 %v104
  %v118 = vpop.f32.mrf.mxu0
  %v119 = vadd.f32 %v88, %v118
  %v120 = vpop.f32.mrf.mxu0
  %v121 = vadd.f32 %v88, %v120
  %122 = vmatmul.bf16.gmra.mxu0 %v107
  %v123 = vpop.f32.mrf.mxu0
  %v124 = vadd.f32 %v88, %v123
  %v125 = vpop.f32.mrf.mxu0
  %v126 = vadd.f32 %v88, %v125
  %127 = vdwg.mxu0
  %v128 = vmax.f32 %v119, 0.0
  %v129 = vmax.f32 %v121, 0.0
  %v130 = vmax.f32 %v124, 0.0
  %v131 = vmax.f32 %v126, 0.0
  %v132 = vpack.c.bf16 %v129, %v128
  %v133 = vpack.c.bf16 %v131, %v130
  %v134 = vld [vmem:[%s4] sm:$0xf]
  %v135 = vld [vmem:[%s4 + $0x4] sm:$0xf]
  %v136 = vld [vmem:[%s4 + $0x8] sm:$0xf]
  %v137 = vld [vmem:[%s4 + $0xc] sm:$0xf]
  %v138 = vld [vmem:[%s5] sm:$0x1]
  %v140 = vperm.slane %v138, 0
  %v146 = vunpack.c.l.b16 %v134
  %v147 = vunpack.c.l.b16 %v135
  %v148 = vunpack.c.l.b16 %v136
  %v149 = vunpack.c.l.b16 %v137
  %v150 = vpack.c.b16 %v147, %v146
  %v151 = vpack.c.b16 %v149, %v148
  %v155 = vsel %vm102, %v132, 0
  %v158 = vsel %vm102, %v133, 0
  %160 = vmatpush.bf16.msra.mxu0 0
  %161 = vmatpush.bf16.msra.mxu0 0
  %162 = vmatpush.bf16.msra.mxu0 0
  %163 = vmatpush.bf16.msra.mxu0 0
  %164 = vmatpush.bf16.msra.mxu0 0
  %165 = vmatpush.bf16.msra.mxu0 0
  %166 = vmatpush.bf16.msra.mxu0 %v151
  %167 = vmatpush.bf16.msra.mxu0 %v150
  %168 = vmatmul.bf16.gmra.mxu0 %v155
  %v169 = vpop.f32.mrf.mxu0
  %v170 = vadd.f32 %v140, %v169
  %v171 = vpop.f32.mrf.mxu0
  %v172 = vadd.f32 %v140, %v171
  %173 = vmatmul.bf16.gmra.mxu0 %v158
  %v174 = vpop.f32.mrf.mxu0
  %v175 = vadd.f32 %v140, %v174
  %v176 = vpop.f32.mrf.mxu0
  %v177 = vadd.f32 %v140, %v176
  %178 = vdwg.mxu0
  %v179 = vmax.f32 %v170, 0.0
  %v180 = vmax.f32 %v172, 0.0
  %v181 = vmax.f32 %v175, 0.0
  %v182 = vmax.f32 %v177, 0.0
  %v183 = vand.u32 2147483647, %v170
  %v184 = vand.u32 2147483647, %v172
  %v185 = vand.u32 2147483647, %v175
  %v186 = vand.u32 2147483647, %v177
  %v187 = vsub.f32 0.0, %v183
  %v188 = vsub.f32 0.0, %v184
  %v189 = vsub.f32 0.0, %v185
  %v190 = vsub.f32 0.0, %v186
  %v191 = vmul.f32 %v187, 1.442695
  %v192 = vpow.pop %v191
  %v193 = vmul.f32 %v188, 1.442695
  %v194 = vpow.pop %v193
  %v195 = vmul.f32 %v189, 1.442695
  %v196 = vpow.pop %v195
  %v197 = vmul.f32 %v190, 1.442695
  %v198 = vpow.pop %v197
  %v199 = vadd.f32 %v192, 1.0
  %v200 = vadd.f32 %v194, 1.0
  %v201 = vadd.f32 %v196, 1.0
  %v202 = vadd.f32 %v198, 1.0
  %v203 = vlog2.pop %v199
  %v204 = vmul.f32 %v203, 0.6931472
  %v205 = vlog2.pop %v200
  %v206 = vmul.f32 %v205, 0.6931472
  %v207 = vlog2.pop %v201
  %v208 = vmul.f32 %v207, 0.6931472
  %v209 = vlog2.pop %v202
  %v210 = vmul.f32 %v209, 0.6931472
  %v211 = vadd.f32 %v179, %v204
  %v212 = vadd.f32 %v180, %v206
  %v213 = vadd.f32 %v181, %v208
  %v214 = vadd.f32 %v182, %v210
  %215 = vst [vmem:[%s6] sm:$0xff] %v211
  %216 = vst [vmem:[%s6 + $0x8] sm:$0xff] %v212
  %217 = vst [vmem:[%s6 + $0x10] sm:$0xff] %v213
  %218 = vst [vmem:[%s6 + $0x18] sm:$0xff] %v214
  // Predicated region
  $region26: #{identifier_forward_token.2} parent=0 // pred_check
    _
  $region27: #{identifier_forward_token.2} parent=0 // pred_check_branch
    %220 = sbr.rel (0) target = $region29
  $region28: #{identifier_forward_token.2} parent=0 // pred_region
    _
  $region29: #{identifier_forward_token.2} parent=0 // pred_fallthru
    _
  // Predicated region
  $region30: #{identifier_forward_token.2} parent=0 // pred_check
    _
  $region31: #{identifier_forward_token.2} parent=0 // pred_check_branch
    %222 = sbr.rel (0) target = $region33
  $region32: #{identifier_forward_token.2} parent=0 // pred_region
    _
  $region33: #{identifier_forward_token.2} parent=0 // pred_fallthru
    _

</llo_original>
